<compile_context>
chip_gen: v7x
topology: tpu7x:2x2x1
jax: 0.10.0
libtpu: 0.0.40
codegen_flags: <defaults>
</compile_context>

<pallas_src>
import jax
import jax.numpy as jnp
from jax.experimental import pallas as pl
from jax.experimental.pallas import tpu as pltpu

LANE = 128  # all feature dims padded to one full 128-lane vreg


# ---------------------------------------------------------------------------
# Pallas kernel: fused 4-layer MLP (Linear+ReLU x3, final Linear), one batch
# tile per grid step. Feature dims are pre-padded to 128 lanes.
# ---------------------------------------------------------------------------
def _iris_mlp_kernel(x_ref,
                     w1_ref, b1_ref,
                     w2_ref, b2_ref,
                     w3_ref, b3_ref,
                     w4_ref, b4_ref,
                     o_ref):
    x = x_ref[...].astype(jnp.float32)          # (bn, 4)
    w1 = w1_ref[...].astype(jnp.float32)        # (4, 128), kept f32 (VPU path)

    # Layer 1: K=4 contraction as 4 VPU broadcast-FMAs (K=4 would use ~1.5-3%
    # of the MXU contraction depth; the push/pop latency would dominate).
    h = x[:, 0:1] * w1[0:1, :]
    for k in range(1, 4):
        h = h + x[:, k:k + 1] * w1[k:k + 1, :]
    h = jnp.maximum(h + b1_ref[...], 0.0)       # f32 bias + ReLU

    mm_dtype = w2_ref.dtype                     # bf16 (MXU-native) or f32

    # Layer 2: 128 -> 128 (logical 64, zero-padded)
    h = jnp.dot(h.astype(mm_dtype), w2_ref[...],
                preferred_element_type=jnp.float32)
    h = jnp.maximum(h + b2_ref[...], 0.0)

    # Layer 3: 128 -> 128 (logical 64 -> 32, zero-padded)
    h = jnp.dot(h.astype(mm_dtype), w3_ref[...],
                preferred_element_type=jnp.float32)
    h = jnp.maximum(h + b3_ref[...], 0.0)

    # Layer 4: 128 -> 128 (logical 32 -> 3, zero-padded) -> lane-dense store
    out = jnp.dot(h.astype(mm_dtype), w4_ref[...],
                  preferred_element_type=jnp.float32) + b4_ref[...]
    o_ref[...] = out.astype(o_ref.dtype)


def _pad2d(a, rows, cols):
    return jnp.pad(a, ((0, rows - a.shape[0]), (0, cols - a.shape[1])))


def iris_network_forward(x, params, *, block_n=512, use_bf16=True):
    """Fused IrisNetwork forward. x: [N, 4] f32 -> [N, 3] f32."""
    (w1, b1), (w2, b2), (w3, b3), (w4, b4) = params
    n, in_f = x.shape
    out_f = w4.shape[1]

    # Zero-pad every feature dim to 128 lanes (free on the MXU, removes masked
    # lane work and makes the output store lane-dense). Padded hidden lanes
    # stay exactly zero through ReLU, padded output lanes stay zero.
    w1p = _pad2d(w1, in_f, LANE)
    b1p = _pad2d(b1, 1, LANE)
    w2p = _pad2d(w2, LANE, LANE)
    b2p = _pad2d(b2, 1, LANE)
    w3p = _pad2d(w3, LANE, LANE)
    b3p = _pad2d(b3, 1, LANE)
    w4p = _pad2d(w4, LANE, LANE)
    b4p = _pad2d(b4, 1, LANE)

    # bf16 weights for the MXU layers; biases and layer-1 weights stay f32
    # (bias+ReLU math is f32 everywhere -> safe on v5e's bf16-less VPU).
    mm_dtype = jnp.bfloat16 if use_bf16 else jnp.float32
    w2p = w2p.astype(mm_dtype)
    w3p = w3p.astype(mm_dtype)
    w4p = w4p.astype(mm_dtype)

    # Batch tiling: no wrapper-side pad of x. Partial last tile is handled by
    # Pallas (rows are independent); tile is sublane-aligned (multiple of 8).
    bn = min(block_n, ((n + 7) // 8) * 8)
    grid = (pl.cdiv(n, bn),)

    def full_spec(arr):
        # Grid-invariant full-array block (weights/biases stay VMEM-resident).
        return pl.BlockSpec(arr.shape, lambda i: (0, 0))

    out = pl.pallas_call(
        _iris_mlp_kernel,
        out_shape=jax.ShapeDtypeStruct((n, LANE), jnp.float32),
        grid_spec=pltpu.PrefetchScalarGridSpec(
            num_scalar_prefetch=0,
            grid=grid,
            in_specs=[
                pl.BlockSpec((bn, in_f), lambda i: (i, 0)),   # x batch tile
                full_spec(w1p), full_spec(b1p),
                full_spec(w2p), full_spec(b2p),
                full_spec(w3p), full_spec(b3p),
                full_spec(w4p), full_spec(b4p),
            ],
            out_specs=pl.BlockSpec((bn, LANE), lambda i: (i, 0)),
        ),
        compiler_params=pltpu.CompilerParams(
            dimension_semantics=("parallel",)),
    )(x, w1p, b1p, w2p, b2p, w3p, b3p, w4p, b4p)

    return out[:, :out_f]


# ---------------------------------------------------------------------------
# Deterministic parameter init (PyTorch nn.Linear-style uniform bounds)
# ---------------------------------------------------------------------------
def init_params(key):
    dims = [(4, 128), (128, 64), (64, 32), (32, 3)]
    params = []
    for fan_in, fan_out in dims:
        key, kw, kb = jax.random.split(key, 3)
        bound = 1.0 / (fan_in ** 0.5)
        w = jax.random.uniform(kw, (fan_in, fan_out), jnp.float32,
                               minval=-bound, maxval=bound)
        b = jax.random.uniform(kb, (1, fan_out), jnp.float32,
                               minval=-bound, maxval=bound)
        params.append((w, b))
    return params


def reference_forward(x, params):
    h = x
    for i, (w, b) in enumerate(params):
        h = h @ w + b
        if i < len(params) - 1:
            h = jnp.maximum(h, 0.0)
    return h


if __name__ == "__main__":
    key = jax.random.PRNGKey(0)
    kp, kx1, kx2 = jax.random.split(key, 3)
    params = init_params(kp)

    # 1) f32 path, tight tolerance (exact-precision check).
    x1 = jax.random.normal(kx1, (8, 4), jnp.float32)
    out1 = jax.block_until_ready(
        iris_network_forward(x1, params, use_bf16=False))
    ref1 = reference_forward(x1, params)
    assert out1.shape == (8, 3), out1.shape
    assert jnp.allclose(out1, ref1, atol=1e-5, rtol=1e-5), \
        f"f32 max abs err {jnp.max(jnp.abs(out1 - ref1))}"

    # 2) bf16-MXU path + ragged batch (partial final tile), looser tolerance.
    x2 = jax.random.normal(kx2, (37, 4), jnp.float32)
    out2 = jax.block_until_ready(
        iris_network_forward(x2, params, use_bf16=True))
    ref2 = reference_forward(x2, params)
    assert out2.shape == (37, 3), out2.shape
    assert jnp.allclose(out2, ref2, atol=5e-2, rtol=5e-2), \
        f"bf16 max abs err {jnp.max(jnp.abs(out2 - ref2))}"

    print("KERNEL_OK")
</pallas_src>

<mosaic_0001>
module attributes {stable_mosaic.version = 11 : i64} {
  func.func @_iris_mlp_kernel(%arg0: i32, %arg1: memref<8x4xf32, #tpu.memory_space<vmem>>, %arg2: memref<4x128xf32, #tpu.memory_space<vmem>>, %arg3: memref<1x128xf32, #tpu.memory_space<vmem>>, %arg4: memref<128x128xf32, #tpu.memory_space<vmem>>, %arg5: memref<1x128xf32, #tpu.memory_space<vmem>>, %arg6: memref<128x128xf32, #tpu.memory_space<vmem>>, %arg7: memref<1x128xf32, #tpu.memory_space<vmem>>, %arg8: memref<128x128xf32, #tpu.memory_space<vmem>>, %arg9: memref<1x128xf32, #tpu.memory_space<vmem>>, %arg10: memref<8x128xf32, #tpu.memory_space<vmem>>) attributes {dimension_semantics = [#tpu.dimension_semantics<parallel>], iteration_bounds = array<i64: 1>, scalar_prefetch = 0 : i64, scratch_operands = 0 : i64, tpu.core_type = #tpu.core_type<tc>, window_params = [{transform_indices = @transform_0, window_bounds = array<i64: 8, 4>}, {pipeline_mode = #tpu.pipeline_mode<synchronous>, transform_indices = @transform_1, window_bounds = array<i64: 4, 128>}, {pipeline_mode = #tpu.pipeline_mode<synchronous>, transform_indices = @transform_2, window_bounds = array<i64: 1, 128>}, {pipeline_mode = #tpu.pipeline_mode<synchronous>, transform_indices = @transform_3, window_bounds = array<i64: 128, 128>}, {pipeline_mode = #tpu.pipeline_mode<synchronous>, transform_indices = @transform_4, window_bounds = array<i64: 1, 128>}, {pipeline_mode = #tpu.pipeline_mode<synchronous>, transform_indices = @transform_5, window_bounds = array<i64: 128, 128>}, {pipeline_mode = #tpu.pipeline_mode<synchronous>, transform_indices = @transform_6, window_bounds = array<i64: 1, 128>}, {pipeline_mode = #tpu.pipeline_mode<synchronous>, transform_indices = @transform_7, window_bounds = array<i64: 128, 128>}, {pipeline_mode = #tpu.pipeline_mode<synchronous>, transform_indices = @transform_8, window_bounds = array<i64: 1, 128>}, {transform_indices = @transform_9, window_bounds = array<i64: 8, 128>}]} {
    %c0 = arith.constant 0 : index
    %c0_0 = arith.constant 0 : index
    %0 = vector.load %arg1[%c0, %c0_0] : memref<8x4xf32, #tpu.memory_space<vmem>>, vector<8x4xf32>
    %c0_1 = arith.constant 0 : index
    %c0_2 = arith.constant 0 : index
    %1 = vector.load %arg2[%c0_1, %c0_2] : memref<4x128xf32, #tpu.memory_space<vmem>>, vector<4x128xf32>
    %2 = vector.extract_strided_slice %0 {offsets = [0, 0], sizes = [8, 1], strides = [1, 1]} : vector<8x4xf32> to vector<8x1xf32>
    %3 = vector.extract_strided_slice %1 {offsets = [0, 0], sizes = [1, 128], strides = [1, 1]} : vector<4x128xf32> to vector<1x128xf32>
    %4 = vector.broadcast %2 : vector<8x1xf32> to vector<8x128xf32>
    %5 = vector.broadcast %3 : vector<1x128xf32> to vector<8x128xf32>
    %6 = arith.mulf %4, %5 : vector<8x128xf32>
    %7 = vector.extract_strided_slice %0 {offsets = [0, 1], sizes = [8, 1], strides = [1, 1]} : vector<8x4xf32> to vector<8x1xf32>
    %8 = vector.extract_strided_slice %1 {offsets = [1, 0], sizes = [1, 128], strides = [1, 1]} : vector<4x128xf32> to vector<1x128xf32>
    %9 = vector.broadcast %7 : vector<8x1xf32> to vector<8x128xf32>
    %10 = vector.broadcast %8 : vector<1x128xf32> to vector<8x128xf32>
    %11 = arith.mulf %9, %10 : vector<8x128xf32>
    %12 = arith.addf %6, %11 : vector<8x128xf32>
    %13 = vector.extract_strided_slice %0 {offsets = [0, 2], sizes = [8, 1], strides = [1, 1]} : vector<8x4xf32> to vector<8x1xf32>
    %14 = vector.extract_strided_slice %1 {offsets = [2, 0], sizes = [1, 128], strides = [1, 1]} : vector<4x128xf32> to vector<1x128xf32>
    %15 = vector.broadcast %13 : vector<8x1xf32> to vector<8x128xf32>
    %16 = vector.broadcast %14 : vector<1x128xf32> to vector<8x128xf32>
    %17 = arith.mulf %15, %16 : vector<8x128xf32>
    %18 = arith.addf %12, %17 : vector<8x128xf32>
    %19 = vector.extract_strided_slice %0 {offsets = [0, 3], sizes = [8, 1], strides = [1, 1]} : vector<8x4xf32> to vector<8x1xf32>
    %20 = vector.extract_strided_slice %1 {offsets = [3, 0], sizes = [1, 128], strides = [1, 1]} : vector<4x128xf32> to vector<1x128xf32>
    %21 = vector.broadcast %19 : vector<8x1xf32> to vector<8x128xf32>
    %22 = vector.broadcast %20 : vector<1x128xf32> to vector<8x128xf32>
    %23 = arith.mulf %21, %22 : vector<8x128xf32>
    %24 = arith.addf %18, %23 : vector<8x128xf32>
    %c0_3 = arith.constant 0 : index
    %c0_4 = arith.constant 0 : index
    %25 = vector.load %arg3[%c0_3, %c0_4] : memref<1x128xf32, #tpu.memory_space<vmem>>, vector<1x128xf32>
    %26 = vector.broadcast %25 : vector<1x128xf32> to vector<8x128xf32>
    %27 = arith.addf %24, %26 : vector<8x128xf32>
    %cst = arith.constant 0.000000e+00 : f32
    %28 = vector.broadcast %cst : f32 to vector<8x128xf32>
    %29 = arith.maximumf %27, %28 : vector<8x128xf32>
    %c0_5 = arith.constant 0 : index
    %c0_6 = arith.constant 0 : index
    %30 = vector.load %arg4[%c0_5, %c0_6] : memref<128x128xf32, #tpu.memory_space<vmem>>, vector<128x128xf32>
    %cst_7 = arith.constant dense<0.000000e+00> : vector<8x128xf32>
    %31 = tpu.matmul %29, %30, %cst_7 {dimension_numbers = #tpu.dot_dimension_numbers<[1], [0], [0], [1], [0, 0, 1, 1], [], []>} : vector<8x128xf32>, vector<128x128xf32>, vector<8x128xf32> -> vector<8x128xf32>
    %c0_8 = arith.constant 0 : index
    %c0_9 = arith.constant 0 : index
    %32 = vector.load %arg5[%c0_8, %c0_9] : memref<1x128xf32, #tpu.memory_space<vmem>>, vector<1x128xf32>
    %33 = vector.broadcast %32 : vector<1x128xf32> to vector<8x128xf32>
    %34 = arith.addf %31, %33 : vector<8x128xf32>
    %cst_10 = arith.constant 0.000000e+00 : f32
    %35 = vector.broadcast %cst_10 : f32 to vector<8x128xf32>
    %36 = arith.maximumf %34, %35 : vector<8x128xf32>
    %c0_11 = arith.constant 0 : index
    %c0_12 = arith.constant 0 : index
    %37 = vector.load %arg6[%c0_11, %c0_12] : memref<128x128xf32, #tpu.memory_space<vmem>>, vector<128x128xf32>
    %cst_13 = arith.constant dense<0.000000e+00> : vector<8x128xf32>
    %38 = tpu.matmul %36, %37, %cst_13 {dimension_numbers = #tpu.dot_dimension_numbers<[1], [0], [0], [1], [0, 0, 1, 1], [], []>} : vector<8x128xf32>, vector<128x128xf32>, vector<8x128xf32> -> vector<8x128xf32>
    %c0_14 = arith.constant 0 : index
    %c0_15 = arith.constant 0 : index
    %39 = vector.load %arg7[%c0_14, %c0_15] : memref<1x128xf32, #tpu.memory_space<vmem>>, vector<1x128xf32>
    %40 = vector.broadcast %39 : vector<1x128xf32> to vector<8x128xf32>
    %41 = arith.addf %38, %40 : vector<8x128xf32>
    %cst_16 = arith.constant 0.000000e+00 : f32
    %42 = vector.broadcast %cst_16 : f32 to vector<8x128xf32>
    %43 = arith.maximumf %41, %42 : vector<8x128xf32>
    %c0_17 = arith.constant 0 : index
    %c0_18 = arith.constant 0 : index
    %44 = vector.load %arg8[%c0_17, %c0_18] : memref<128x128xf32, #tpu.memory_space<vmem>>, vector<128x128xf32>
    %cst_19 = arith.constant dense<0.000000e+00> : vector<8x128xf32>
    %45 = tpu.matmul %43, %44, %cst_19 {dimension_numbers = #tpu.dot_dimension_numbers<[1], [0], [0], [1], [0, 0, 1, 1], [], []>} : vector<8x128xf32>, vector<128x128xf32>, vector<8x128xf32> -> vector<8x128xf32>
    %c0_20 = arith.constant 0 : index
    %c0_21 = arith.constant 0 : index
    %46 = vector.load %arg9[%c0_20, %c0_21] : memref<1x128xf32, #tpu.memory_space<vmem>>, vector<1x128xf32>
    %47 = vector.broadcast %46 : vector<1x128xf32> to vector<8x128xf32>
    %48 = arith.addf %45, %47 : vector<8x128xf32>
    %c0_22 = arith.constant 0 : index
    %c0_23 = arith.constant 0 : index
    %49 = vector.load %arg10[%c0_22, %c0_23] : memref<8x128xf32, #tpu.memory_space<vmem>>, vector<8x128xf32>
    tpu.vector_store %arg10[%c0_22, %c0_23], %48 {strides = array<i32>} : memref<8x128xf32, #tpu.memory_space<vmem>>, vector<8x128xf32>,
    return
  }
  func.func @transform_0(%arg0: i32) -> (i32, i32) {
    %c0_i32 = arith.constant 0 : i32
    %c0_i32_0 = arith.constant 0 : i32
    return %arg0, %c0_i32 : i32, i32
  }
  func.func @transform_1(%arg0: i32) -> (i32, i32) {
    %c0_i32 = arith.constant 0 : i32
    %c0_i32_0 = arith.constant 0 : i32
    %c0_i32_1 = arith.constant 0 : i32
    return %c0_i32, %c0_i32_0 : i32, i32
  }
  func.func @transform_2(%arg0: i32) -> (i32, i32) {
    %c0_i32 = arith.constant 0 : i32
    %c0_i32_0 = arith.constant 0 : i32
    %c0_i32_1 = arith.constant 0 : i32
    return %c0_i32, %c0_i32_0 : i32, i32
  }
  func.func @transform_3(%arg0: i32) -> (i32, i32) {
    %c0_i32 = arith.constant 0 : i32
    %c0_i32_0 = arith.constant 0 : i32
    %c0_i32_1 = arith.constant 0 : i32
    return %c0_i32, %c0_i32_0 : i32, i32
  }
  func.func @transform_4(%arg0: i32) -> (i32, i32) {
    %c0_i32 = arith.constant 0 : i32
    %c0_i32_0 = arith.constant 0 : i32
    %c0_i32_1 = arith.constant 0 : i32
    return %c0_i32, %c0_i32_0 : i32, i32
  }
  func.func @transform_5(%arg0: i32) -> (i32, i32) {
    %c0_i32 = arith.constant 0 : i32
    %c0_i32_0 = arith.constant 0 : i32
    %c0_i32_1 = arith.constant 0 : i32
    return %c0_i32, %c0_i32_0 : i32, i32
  }
  func.func @transform_6(%arg0: i32) -> (i32, i32) {
    %c0_i32 = arith.constant 0 : i32
    %c0_i32_0 = arith.constant 0 : i32
    %c0_i32_1 = arith.constant 0 : i32
    return %c0_i32, %c0_i32_0 : i32, i32
  }
  func.func @transform_7(%arg0: i32) -> (i32, i32) {
    %c0_i32 = arith.constant 0 : i32
    %c0_i32_0 = arith.constant 0 : i32
    %c0_i32_1 = arith.constant 0 : i32
    return %c0_i32, %c0_i32_0 : i32, i32
  }
  func.func @transform_8(%arg0: i32) -> (i32, i32) {
    %c0_i32 = arith.constant 0 : i32
    %c0_i32_0 = arith.constant 0 : i32
    %c0_i32_1 = arith.constant 0 : i32
    return %c0_i32, %c0_i32_0 : i32, i32
  }
  func.func @transform_9(%arg0: i32) -> (i32, i32) {
    %c0_i32 = arith.constant 0 : i32
    %c0_i32_0 = arith.constant 0 : i32
    return %arg0, %c0_i32 : i32, i32
  }
}

</mosaic_0001>

<llo_original>
// kernel: tpu_custom_call.1
$region0: #{tpu_custom_call.1}
  #allocation0 [shape = 'u32[]', space=smem, size = 0x4, offset = 0x4, fixed_abs, tag = 'smem constant byte address 0x4 - core index']
  #allocation1 [shape = 'u32[144,128]{1,0:T(1,128)}', space=vmem, size = 0x12000, scoped, tag = 'internal scratch']
  %s0 = inlined_call_operand.vmem [shape: f32[8,4], index: 0, kind: input, shape index: {}]
  %s1 = inlined_call_operand.vmem [shape: f32[4,128], index: 1, kind: input, shape index: {}]
  %s2 = inlined_call_operand.vmem [shape: f32[1,128], index: 2, kind: input, shape index: {}]
  %s3 = inlined_call_operand.hbm [shape: f32[128,128], index: 3, kind: input, shape index: {}]
  %s4 = inlined_call_operand.vmem [shape: f32[1,128], index: 4, kind: input, shape index: {}]
  %s5 = inlined_call_operand.hbm [shape: f32[128,128], index: 5, kind: input, shape index: {}]
  %s6 = inlined_call_operand.vmem [shape: f32[1,128], index: 6, kind: input, shape index: {}]
  %s7 = inlined_call_operand.hbm [shape: f32[128,128], index: 7, kind: input, shape index: {}]
  %s8 = inlined_call_operand.vmem [shape: f32[1,128], index: 8, kind: input, shape index: {}]
  %s9 = inlined_call_operand.hbm [shape: f32[8,128], index: 9, kind: output, shape index: {}]
  %s10 = sld [smem:[#allocation0]]
  $region58: #{tpu_custom_call.1} parent=0
    _
  %s12 = ssub.s32 1, %s10
  %s13 = scalar_select 0, %s12, %s10
  $region1: #{tpu_custom_call.1} parent=0
    #allocation2 [shape = 'u8[65536]{0}', space=vmem, size = 0x10000, scoped, tag = 'input window, operand 3, single buffered']
    #allocation3 [shape = 's32[1]{0}', space=sflag, size = 0x4, scoped, tag = 'scoped memory for tpu_custom_call.1']
    #allocation4 [shape = 's32[1]{0}', space=sflag, size = 0x4, scoped, tag = 'scoped memory for tpu_custom_call.1']
    #allocation5 [shape = 'u8[65536]{0}', space=vmem, size = 0x10000, scoped, tag = 'input window, operand 5, single buffered']
    #allocation6 [shape = 's32[1]{0}', space=sflag, size = 0x4, scoped, tag = 'scoped memory for tpu_custom_call.1']
    #allocation7 [shape = 'u8[65536]{0}', space=vmem, size = 0x10000, scoped, tag = 'input window, operand 7, single buffered']
    #allocation8 [shape = 'u8[4096]{0}', space=vmem, size = 0x1000, scoped, tag = 'output window, operand 0, single buffered']
    %14 = vsyncpa [#allocation3], 0
    %15 = vsyncpa [#allocation6], 0
    %16 = vsyncpa [#allocation4], 0
    // Predicated region
    $region2: #{tpu_custom_call.1} parent=1 // pred_check
      _
    $region3: #{tpu_custom_call.1} parent=1 // pred_check_branch
      %18 = sbr.rel (0) target = $region5
    $region4: #{tpu_custom_call.1} parent=1 // pred_region
      _
    $region5: #{tpu_custom_call.1} parent=1 // pred_fallthru
      _
    // Predicated region
    $region6: #{tpu_custom_call.1} parent=1 // pred_check
      _
    $region7: #{tpu_custom_call.1} parent=1 // pred_check_branch
      %20 = sbr.rel (0) target = $region9
    $region8: #{tpu_custom_call.1} parent=1 // pred_region
      _
    $region9: #{tpu_custom_call.1} parent=1 // pred_fallthru
      _
    // Predicated region
    $region10: #{tpu_custom_call.1} parent=1 // pred_check
      _
    $region11: #{tpu_custom_call.1} parent=1 // pred_check_branch
      %22 = sbr.rel (0) target = $region13
    $region12: #{tpu_custom_call.1} parent=1 // pred_region
      _
    $region13: #{tpu_custom_call.1} parent=1 // pred_fallthru
      _
    // Predicated region
    $region14: #{tpu_custom_call.1} parent=1 // pred_check
      _
    $region15: #{tpu_custom_call.1} parent=1 // pred_check_branch
      %24 = sbr.rel (0) target = $region17
    $region16: #{tpu_custom_call.1} parent=1 // pred_region
      %s26 = ssub.s32 2048, 2048
      %27 = vsyncadd [#allocation3], %s26
      %s28 = sshll.u32 [#allocation2], 4
      %s29 = int_to_ptr.vmem [resolvable:$true] %s28
      %34 = dma.hbm_to_vmem [thread:$0]  %s3, 2048, %s29, [#allocation3], 128, 128, 8
    $region17: #{tpu_custom_call.1} parent=1 // pred_fallthru
      _
    // Predicated region
    $region18: #{tpu_custom_call.1} parent=1 // pred_check
      _
    $region19: #{tpu_custom_call.1} parent=1 // pred_check_branch
      %36 = sbr.rel (0) target = $region21
    $region20: #{tpu_custom_call.1} parent=1 // pred_region
      _
    $region21: #{tpu_custom_call.1} parent=1 // pred_fallthru
      _
    // Predicated region
    $region22: #{tpu_custom_call.1} parent=1 // pred_check
      _
    $region23: #{tpu_custom_call.1} parent=1 // pred_check_branch
      %38 = sbr.rel (0) target = $region25
    $region24: #{tpu_custom_call.1} parent=1 // pred_region
      %s40 = ssub.s32 2048, 2048
      %41 = vsyncadd [#allocation6], %s40
      %s42 = sshll.u32 [#allocation5], 4
      %s43 = int_to_ptr.vmem [resolvable:$true] %s42
      %48 = dma.hbm_to_vmem [thread:$0]  %s5, 2048, %s43, [#allocation6], 128, 128, 8
    $region25: #{tpu_custom_call.1} parent=1 // pred_fallthru
      _
    // Predicated region
    $region26: #{tpu_custom_call.1} parent=1 // pred_check
      _
    $region27: #{tpu_custom_call.1} parent=1 // pred_check_branch
      %50 = sbr.rel (0) target = $region29
    $region28: #{tpu_custom_call.1} parent=1 // pred_region
      _
    $region29: #{tpu_custom_call.1} parent=1 // pred_fallthru
      _
    // Predicated region
    $region30: #{tpu_custom_call.1} parent=1 // pred_check
      _
    $region31: #{tpu_custom_call.1} parent=1 // pred_check_branch
      %52 = sbr.rel (0) target = $region33
    $region32: #{tpu_custom_call.1} parent=1 // pred_region
      %s54 = ssub.s32 2048, 2048
      %55 = vsyncadd [#allocation6], %s54
      %s56 = sshll.u32 [#allocation7], 4
      %s57 = int_to_ptr.vmem [resolvable:$true] %s56
      %62 = dma.hbm_to_vmem [thread:$0]  %s7, 2048, %s57, [#allocation6], 128, 128, 8
    $region33: #{tpu_custom_call.1} parent=1 // pred_fallthru
      _
    // Predicated region
    $region34: #{tpu_custom_call.1} parent=1 // pred_check
      _
    $region35: #{tpu_custom_call.1} parent=1 // pred_check_branch
      %64 = sbr.rel (0) target = $region37
    $region36: #{tpu_custom_call.1} parent=1 // pred_region
      _
    $region37: #{tpu_custom_call.1} parent=1 // pred_fallthru
      _
    // Predicated region
    $region38: #{tpu_custom_call.1} parent=1 // pred_check
      _
    $region39: #{tpu_custom_call.1} parent=1 // pred_check_branch
      %66 = sbr.rel (0) target = $region41
    $region40: #{tpu_custom_call.1} parent=1 // pred_region
      %67 = dma.done [#allocation3], 2048
    $region41: #{tpu_custom_call.1} parent=1 // pred_fallthru
      _
    // Predicated region
    $region42: #{tpu_custom_call.1} parent=1 // pred_check
      _
    $region43: #{tpu_custom_call.1} parent=1 // pred_check_branch
      %69 = sbr.rel (0) target = $region45
    $region44: #{tpu_custom_call.1} parent=1 // pred_region
      %70 = dma.done [#allocation6], 2048
    $region45: #{tpu_custom_call.1} parent=1 // pred_fallthru
      _
    // Predicated region
    $region46: #{tpu_custom_call.1} parent=1 // pred_check
      _
    $region47: #{tpu_custom_call.1} parent=1 // pred_check_branch
      %72 = sbr.rel (0) target = $region49
    $region48: #{tpu_custom_call.1} parent=1 // pred_region
      %73 = dma.done [#allocation6], 2048
    $region49: #{tpu_custom_call.1} parent=1 // pred_fallthru
      _
    %v74 = vld [vmem:[%s0] sm:$0xff]
    %v75 = vld [vmem:[%s1] sm:$0xf]
    %77 = vset.pattern.permute.xlu0 0
    %78 = vperm.xlu0 %77, %v74
    %v79 = vpop.permute.xlu0 %78
    %v81 = vlaneseq
    %v82 = vshrl.u32 %v81, 7
    %v83 = vsub.s32 0, %v82
    %v84 = vrot.slane %v75, %v83
    %v85 = vmul.f32 %v79, %v84
    %86 = vset.pattern.permute.xlu0 1
    %87 = vperm.xlu0 %86, %v74
    %v88 = vpop.permute.xlu0 %87
    %v90 = vlaneseq
    %v91 = vshrl.u32 %v90, 7
    %v92 = vsub.s32 1, %v91
    %v93 = vrot.slane %v75, %v92
    %v94 = vmul.f32 %v88, %v93
    %v95 = vadd.f32 %v85, %v94
    %96 = vset.pattern.permute.xlu0 2
    %97 = vperm.xlu0 %96, %v74
    %v98 = vpop.permute.xlu0 %97
    %v100 = vlaneseq
    %v101 = vshrl.u32 %v100, 7
    %v102 = vsub.s32 2, %v101
    %v103 = vrot.slane %v75, %v102
    %v104 = vmul.f32 %v98, %v103
    %v105 = vadd.f32 %v95, %v104
    %106 = vset.pattern.permute.xlu0 3
    %107 = vperm.xlu0 %106, %v74
    %v108 = vpop.permute.xlu0 %107
    %v110 = vlaneseq
    %v111 = vshrl.u32 %v110, 7
    %v112 = vsub.s32 3, %v111
    %v113 = vrot.slane %v75, %v112
    %v114 = vmul.f32 %v108, %v113
    %v115 = vadd.f32 %v105, %v114
    %v116 = vld [vmem:[%s2] sm:$0x1]
    %v118 = vlaneseq
    %v119 = vshrl.u32 %v118, 7
    %v120 = vsub.s32 0, %v119
    %v121 = vrot.slane %v116, %v120
    %v123 = vadd.f32 %v115, %v121
    %v124 = vmax.f32 %v123, 0.0
    %v125 = vld [vmem:[#allocation2] sm:$0xff]
    %v126 = vld [vmem:[#allocation2 + $0x8] sm:$0xff]
    %v127 = vld [vmem:[#allocation2 + $0x10] sm:$0xff]
    %v128 = vld [vmem:[#allocation2 + $0x18] sm:$0xff]
    %v129 = vld [vmem:[#allocation2 + $0x20] sm:$0xff]
    %v130 = vld [vmem:[#allocation2 + $0x28] sm:$0xff]
    %v131 = vld [vmem:[#allocation2 + $0x30] sm:$0xff]
    %v132 = vld [vmem:[#allocation2 + $0x38] sm:$0xff]
    %v133 = vld [vmem:[#allocation2 + $0x40] sm:$0xff]
    %v134 = vld [vmem:[#allocation2 + $0x48] sm:$0xff]
    %v135 = vld [vmem:[#allocation2 + $0x50] sm:$0xff]
    %v136 = vld [vmem:[#allocation2 + $0x58] sm:$0xff]
    %v137 = vld [vmem:[#allocation2 + $0x60] sm:$0xff]
    %v138 = vld [vmem:[#allocation2 + $0x68] sm:$0xff]
    %v139 = vld [vmem:[#allocation2 + $0x70] sm:$0xff]
    %v140 = vld [vmem:[#allocation2 + $0x78] sm:$0xff]
    %v141 = vld [vmem:[%s4] sm:$0x1]
    %v143 = vlaneseq
    %v144 = vshrl.u32 %v143, 7
    %v145 = vsub.s32 0, %v144
    %v146 = vrot.slane %v141, %v145
    %148 = vmatprep.subr.mxu0 0.0
    %149 = vmatpush1.msra.mxu0 %v125
    %150 = vmatprep.subr.mxu0 0.0
    %151 = vmatpush1.msra.mxu0 %v126
    %152 = vmatprep.subr.mxu0 0.0
    %153 = vmatpush1.msra.mxu0 %v127
    %154 = vmatprep.subr.mxu0 0.0
    %155 = vmatpush1.msra.mxu0 %v128
    %156 = vmatprep.subr.mxu0 0.0
    %157 = vmatpush1.msra.mxu0 %v129
    %158 = vmatprep.subr.mxu0 0.0
    %159 = vmatpush1.msra.mxu0 %v130
    %160 = vmatprep.subr.mxu0 0.0
    %161 = vmatpush1.msra.mxu0 %v131
    %162 = vmatprep.subr.mxu0 0.0
    %163 = vmatpush1.msra.mxu0 %v132
    %164 = vmatprep.subr.mxu0 0.0
    %165 = vmatpush1.msra.mxu0 %v133
    %166 = vmatprep.subr.mxu0 0.0
    %167 = vmatpush1.msra.mxu0 %v134
    %168 = vmatprep.subr.mxu0 0.0
    %169 = vmatpush1.msra.mxu0 %v135
    %170 = vmatprep.subr.mxu0 0.0
    %171 = vmatpush1.msra.mxu0 %v136
    %172 = vmatprep.subr.mxu0 0.0
    %173 = vmatpush1.msra.mxu0 %v137
    %174 = vmatprep.subr.mxu0 0.0
    %175 = vmatpush1.msra.mxu0 %v138
    %176 = vmatprep.subr.mxu0 0.0
    %177 = vmatpush1.msra.mxu0 %v139
    %178 = vmatprep.subr.mxu0 0.0
    %179 = vmatpush1.msra.mxu0 %v140
    %180 = vmatprep.subr.mxu0 0.0
    %181 = vmatpush1.msra.mxu0 0.0
    %182 = vmatprep.subr.mxu0 0.0
    %183 = vmatpush1.msra.mxu0 0.0
    %184 = vmatprep.subr.mxu0 0.0
    %185 = vmatpush1.msra.mxu0 0.0
    %186 = vmatprep.subr.mxu0 0.0
    %187 = vmatpush1.msra.mxu0 0.0
    %188 = vmatprep.subr.mxu0 0.0
    %189 = vmatpush1.msra.mxu0 0.0
    %190 = vmatprep.subr.mxu0 0.0
    %191 = vmatpush1.msra.mxu0 0.0
    %192 = vmatprep.subr.mxu0 0.0
    %193 = vmatpush1.msra.mxu0 0.0
    %194 = vmatprep.subr.mxu0 0.0
    %195 = vmatpush1.msra.mxu0 0.0
    %196 = vmatprep.subr.mxu0 0.0
    %197 = vmatpush1.msra.mxu0 0.0
    %198 = vmatprep.subr.mxu0 0.0
    %199 = vmatpush1.msra.mxu0 0.0
    %200 = vmatprep.subr.mxu0 0.0
    %201 = vmatpush1.msra.mxu0 0.0
    %202 = vmatprep.subr.mxu0 0.0
    %203 = vmatpush1.msra.mxu0 0.0
    %204 = vmatprep.subr.mxu0 0.0
    %205 = vmatpush1.msra.mxu0 0.0
    %206 = vmatprep.subr.mxu0 0.0
    %207 = vmatpush1.msra.mxu0 0.0
    %208 = vmatprep.subr.mxu0 0.0
    %209 = vmatpush1.msra.mxu0 0.0
    %210 = vmatprep.subr.mxu0 0.0
    %211 = vmatpush1.msra.mxu0 0.0
    %212 = vmatprep.mubr.f32.mxu0 0.0
    %213 = vmatmul.mubr.f32.gmra.mrb[0].mxu0 %v124
    %v214 = vpop.f32.mrb[0].mxu0
    %v215 = vadd.f32 %v146, %v214
    %v216 = vpop.f32.mrb[0].mxu0
    %217 = vdwg.mxu0
    %v218 = vmax.f32 %v215, 0.0
    %v219 = vld [vmem:[#allocation5] sm:$0xff]
    %v220 = vld [vmem:[#allocation5 + $0x8] sm:$0xff]
    %v221 = vld [vmem:[#allocation5 + $0x10] sm:$0xff]
    %v222 = vld [vmem:[#allocation5 + $0x18] sm:$0xff]
    %v223 = vld [vmem:[#allocation5 + $0x20] sm:$0xff]
    %v224 = vld [vmem:[#allocation5 + $0x28] sm:$0xff]
    %v225 = vld [vmem:[#allocation5 + $0x30] sm:$0xff]
    %v226 = vld [vmem:[#allocation5 + $0x38] sm:$0xff]
    %v227 = vld [vmem:[#allocation5 + $0x40] sm:$0xff]
    %v228 = vld [vmem:[#allocation5 + $0x48] sm:$0xff]
    %v229 = vld [vmem:[#allocation5 + $0x50] sm:$0xff]
    %v230 = vld [vmem:[#allocation5 + $0x58] sm:$0xff]
    %v231 = vld [vmem:[#allocation5 + $0x60] sm:$0xff]
    %v232 = vld [vmem:[#allocation5 + $0x68] sm:$0xff]
    %v233 = vld [vmem:[#allocation5 + $0x70] sm:$0xff]
    %v234 = vld [vmem:[#allocation5 + $0x78] sm:$0xff]
    %v235 = vld [vmem:[%s6] sm:$0x1]
    %v237 = vlaneseq
    %v238 = vshrl.u32 %v237, 7
    %v239 = vsub.s32 0, %v238
    %v240 = vrot.slane %v235, %v239
    %242 = vmatprep.subr.mxu0 0.0
    %243 = vmatpush1.msra.mxu0 %v219
    %244 = vmatprep.subr.mxu0 0.0
    %245 = vmatpush1.msra.mxu0 %v220
    %246 = vmatprep.subr.mxu0 0.0
    %247 = vmatpush1.msra.mxu0 %v221
    %248 = vmatprep.subr.mxu0 0.0
    %249 = vmatpush1.msra.mxu0 %v222
    %250 = vmatprep.subr.mxu0 0.0
    %251 = vmatpush1.msra.mxu0 %v223
    %252 = vmatprep.subr.mxu0 0.0
    %253 = vmatpush1.msra.mxu0 %v224
    %254 = vmatprep.subr.mxu0 0.0
    %255 = vmatpush1.msra.mxu0 %v225
    %256 = vmatprep.subr.mxu0 0.0
    %257 = vmatpush1.msra.mxu0 %v226
    %258 = vmatprep.subr.mxu0 0.0
    %259 = vmatpush1.msra.mxu0 %v227
    %260 = vmatprep.subr.mxu0 0.0
    %261 = vmatpush1.msra.mxu0 %v228
    %262 = vmatprep.subr.mxu0 0.0
    %263 = vmatpush1.msra.mxu0 %v229
    %264 = vmatprep.subr.mxu0 0.0
    %265 = vmatpush1.msra.mxu0 %v230
    %266 = vmatprep.subr.mxu0 0.0
    %267 = vmatpush1.msra.mxu0 %v231
    %268 = vmatprep.subr.mxu0 0.0
    %269 = vmatpush1.msra.mxu0 %v232
    %270 = vmatprep.subr.mxu0 0.0
    %271 = vmatpush1.msra.mxu0 %v233
    %272 = vmatprep.subr.mxu0 0.0
    %273 = vmatpush1.msra.mxu0 %v234
    %274 = vmatprep.subr.mxu0 0.0
    %275 = vmatpush1.msra.mxu0 0.0
    %276 = vmatprep.subr.mxu0 0.0
    %277 = vmatpush1.msra.mxu0 0.0
    %278 = vmatprep.subr.mxu0 0.0
    %279 = vmatpush1.msra.mxu0 0.0
    %280 = vmatprep.subr.mxu0 0.0
    %281 = vmatpush1.msra.mxu0 0.0
    %282 = vmatprep.subr.mxu0 0.0
    %283 = vmatpush1.msra.mxu0 0.0
    %284 = vmatprep.subr.mxu0 0.0
    %285 = vmatpush1.msra.mxu0 0.0
    %286 = vmatprep.subr.mxu0 0.0
    %287 = vmatpush1.msra.mxu0 0.0
    %288 = vmatprep.subr.mxu0 0.0
    %289 = vmatpush1.msra.mxu0 0.0
    %290 = vmatprep.subr.mxu0 0.0
    %291 = vmatpush1.msra.mxu0 0.0
    %292 = vmatprep.subr.mxu0 0.0
    %293 = vmatpush1.msra.mxu0 0.0
    %294 = vmatprep.subr.mxu0 0.0
    %295 = vmatpush1.msra.mxu0 0.0
    %296 = vmatprep.subr.mxu0 0.0
    %297 = vmatpush1.msra.mxu0 0.0
    %298 = vmatprep.subr.mxu0 0.0
    %299 = vmatpush1.msra.mxu0 0.0
    %300 = vmatprep.subr.mxu0 0.0
    %301 = vmatpush1.msra.mxu0 0.0
    %302 = vmatprep.subr.mxu0 0.0
    %303 = vmatpush1.msra.mxu0 0.0
    %304 = vmatprep.subr.mxu0 0.0
    %305 = vmatpush1.msra.mxu0 0.0
    %306 = vmatprep.mubr.f32.mxu0 0.0
    %307 = vmatmul.mubr.f32.gmra.mrb[0].mxu0 %v218
    %v308 = vpop.f32.mrb[0].mxu0
    %v309 = vadd.f32 %v240, %v308
    %v310 = vpop.f32.mrb[0].mxu0
    %311 = vdwg.mxu0
    %v312 = vmax.f32 %v309, 0.0
    %v313 = vld [vmem:[#allocation7] sm:$0xff]
    %v314 = vld [vmem:[#allocation7 + $0x8] sm:$0xff]
    %v315 = vld [vmem:[#allocation7 + $0x10] sm:$0xff]
    %v316 = vld [vmem:[#allocation7 + $0x18] sm:$0xff]
    %v317 = vld [vmem:[#allocation7 + $0x20] sm:$0xff]
    %v318 = vld [vmem:[#allocation7 + $0x28] sm:$0xff]
    %v319 = vld [vmem:[#allocation7 + $0x30] sm:$0xff]
    %v320 = vld [vmem:[#allocation7 + $0x38] sm:$0xff]
    %v321 = vld [vmem:[#allocation7 + $0x40] sm:$0xff]
    %v322 = vld [vmem:[#allocation7 + $0x48] sm:$0xff]
    %v323 = vld [vmem:[#allocation7 + $0x50] sm:$0xff]
    %v324 = vld [vmem:[#allocation7 + $0x58] sm:$0xff]
    %v325 = vld [vmem:[#allocation7 + $0x60] sm:$0xff]
    %v326 = vld [vmem:[#allocation7 + $0x68] sm:$0xff]
    %v327 = vld [vmem:[#allocation7 + $0x70] sm:$0xff]
    %v328 = vld [vmem:[#allocation7 + $0x78] sm:$0xff]
    %v329 = vld [vmem:[%s8] sm:$0x1]
    %v331 = vlaneseq
    %v332 = vshrl.u32 %v331, 7
    %v333 = vsub.s32 0, %v332
    %v334 = vrot.slane %v329, %v333
    %336 = vmatprep.subr.mxu0 0.0
    %337 = vmatpush1.msra.mxu0 %v313
    %338 = vmatprep.subr.mxu0 0.0
    %339 = vmatpush1.msra.mxu0 %v314
    %340 = vmatprep.subr.mxu0 0.0
    %341 = vmatpush1.msra.mxu0 %v315
    %342 = vmatprep.subr.mxu0 0.0
    %343 = vmatpush1.msra.mxu0 %v316
    %344 = vmatprep.subr.mxu0 0.0
    %345 = vmatpush1.msra.mxu0 %v317
    %346 = vmatprep.subr.mxu0 0.0
    %347 = vmatpush1.msra.mxu0 %v318
    %348 = vmatprep.subr.mxu0 0.0
    %349 = vmatpush1.msra.mxu0 %v319
    %350 = vmatprep.subr.mxu0 0.0
    %351 = vmatpush1.msra.mxu0 %v320
    %352 = vmatprep.subr.mxu0 0.0
    %353 = vmatpush1.msra.mxu0 %v321
    %354 = vmatprep.subr.mxu0 0.0
    %355 = vmatpush1.msra.mxu0 %v322
    %356 = vmatprep.subr.mxu0 0.0
    %357 = vmatpush1.msra.mxu0 %v323
    %358 = vmatprep.subr.mxu0 0.0
    %359 = vmatpush1.msra.mxu0 %v324
    %360 = vmatprep.subr.mxu0 0.0
    %361 = vmatpush1.msra.mxu0 %v325
    %362 = vmatprep.subr.mxu0 0.0
    %363 = vmatpush1.msra.mxu0 %v326
    %364 = vmatprep.subr.mxu0 0.0
    %365 = vmatpush1.msra.mxu0 %v327
    %366 = vmatprep.subr.mxu0 0.0
    %367 = vmatpush1.msra.mxu0 %v328
    %368 = vmatprep.subr.mxu0 0.0
    %369 = vmatpush1.msra.mxu0 0.0
    %370 = vmatprep.subr.mxu0 0.0
    %371 = vmatpush1.msra.mxu0 0.0
    %372 = vmatprep.subr.mxu0 0.0
    %373 = vmatpush1.msra.mxu0 0.0
    %374 = vmatprep.subr.mxu0 0.0
    %375 = vmatpush1.msra.mxu0 0.0
    %376 = vmatprep.subr.mxu0 0.0
    %377 = vmatpush1.msra.mxu0 0.0
    %378 = vmatprep.subr.mxu0 0.0
    %379 = vmatpush1.msra.mxu0 0.0
    %380 = vmatprep.subr.mxu0 0.0
    %381 = vmatpush1.msra.mxu0 0.0
    %382 = vmatprep.subr.mxu0 0.0
    %383 = vmatpush1.msra.mxu0 0.0
    %384 = vmatprep.subr.mxu0 0.0
    %385 = vmatpush1.msra.mxu0 0.0
    %386 = vmatprep.subr.mxu0 0.0
    %387 = vmatpush1.msra.mxu0 0.0
    %388 = vmatprep.subr.mxu0 0.0
    %389 = vmatpush1.msra.mxu0 0.0
    %390 = vmatprep.subr.mxu0 0.0
    %391 = vmatpush1.msra.mxu0 0.0
    %392 = vmatprep.subr.mxu0 0.0
    %393 = vmatpush1.msra.mxu0 0.0
    %394 = vmatprep.subr.mxu0 0.0
    %395 = vmatpush1.msra.mxu0 0.0
    %396 = vmatprep.subr.mxu0 0.0
    %397 = vmatpush1.msra.mxu0 0.0
    %398 = vmatprep.subr.mxu0 0.0
    %399 = vmatpush1.msra.mxu0 0.0
    %400 = vmatprep.mubr.f32.mxu0 0.0
    %401 = vmatmul.mubr.f32.gmra.mrb[0].mxu0 %v312
    %v402 = vpop.f32.mrb[0].mxu0
    %v403 = vadd.f32 %v334, %v402
    %v404 = vpop.f32.mrb[0].mxu0
    %405 = vdwg.mxu0
    %406 = vst [vmem:[#allocation8] sm:$0xff] %v403
    // Predicated region
    $region50: #{tpu_custom_call.1} parent=1 // pred_check
      _
    $region51: #{tpu_custom_call.1} parent=1 // pred_check_branch
      %408 = sbr.rel (0) target = $region53
    $region52: #{tpu_custom_call.1} parent=1 // pred_region
      %s410 = ssub.s32 128, 128
      %411 = vsyncadd [#allocation4], %s410
      %s413 = sshll.u32 [#allocation8], 4
      %s414 = int_to_ptr.vmem [resolvable:$true] %s413
      %416 = dma.vmem_to_hbm [thread:$0]  %s414, 128, %s9, [#allocation4]
    $region53: #{tpu_custom_call.1} parent=1 // pred_fallthru
      _
    // Predicated region
    $region54: #{tpu_custom_call.1} parent=1 // pred_check
      _
    $region55: #{tpu_custom_call.1} parent=1 // pred_check_branch
      %418 = sbr.rel (0) target = $region57
    $region56: #{tpu_custom_call.1} parent=1 // pred_region
      %419 = dma.done [#allocation4], 128
    $region57: #{tpu_custom_call.1} parent=1 // pred_fallthru
      _
    %420 = vsyncpa [#allocation3], 1
    %421 = vsyncpa [#allocation6], 1
    %422 = vsyncpa [#allocation4], 1

</llo_original>
